<compile_context>
chip_gen: v6e
topology: v6e:2x2x1
jax: 0.10.0
libtpu: 0.0.40
codegen_flags: <defaults>
</compile_context>

<pallas_src>
import functools

import jax
import jax.numpy as jnp
import numpy as np
from jax.experimental import pallas as pl
from jax.experimental.pallas import tpu as pltpu


def _tt_fused_kernel(*refs, R, scale):
    """Fused TT chain for one block of rows of the first core.

    refs = (c0_ref, mid_1 .. mid_{d-2}, c_last_ref, out_ref) with
      c0_ref:     (bn0, R)               block of the first core
      mid_i_ref:  (R, n_i, R)            full middle core (VMEM resident)
      c_last_ref: (R, n_{d-1})           full last core
      out_ref:    (bn0, n_1, ..., n_{d-1})
    """
    out_ref = refs[-1]
    c_last_ref = refs[-2]
    c0_ref = refs[0]
    mid_refs = refs[1:-2]

    acc = c0_ref[...]                                    # (bn0, R)

    # Middle cores: grow one tensor mode per step; the rank contraction is an
    # unrolled VPU broadcast-FMA over the static, tiny R (no MXU, no reshape).
    for m_ref in mid_refs:
        ci = m_ref[...]                                  # (R, n_i, R)
        new = None
        for r in range(R):
            term = acc[..., r:r + 1][..., None] * ci[r]  # (..., n_i, R)
            new = term if new is None else new + term
        acc = new

    # Last core: fold the static scale into the smallest operand (R x n_last).
    cl = c_last_ref[...]                                 # (R, n_last)
    if scale != 1.0:
        cl = cl * scale
    out = None
    for r in range(R):
        term = acc[..., r:r + 1] * cl[r:r + 1, :]        # (..., n_last) lane-dense
        out = term if out is None else out + term
    out_ref[...] = out.astype(out_ref.dtype)


def _choose_row_block(n0, inner_elems, itemsize=4, max_block_bytes=2 << 20):
    """Pick a block of the leading mode: the output block (x2 pipeline buffers)
    stays well under the scoped VMEM budget on every chip (v7x: 32 MiB default).
    The block must divide n0 and be a multiple of 8 (or equal n0)."""
    if n0 * inner_elems * itemsize <= max_block_bytes:
        return n0
    cap = max(8, max_block_bytes // (inner_elems * itemsize))
    best = n0  # fallback: whole leading mode in one block
    for b in range(8, n0, 8):
        if n0 % b == 0 and b <= cap:
            best = b
    return best


def sub_factorization_forward(cores, tensor_shape, R, init_scale=1.0,
                              block_n0=None):
    """Pallas version of sub_factorization.forward().

    cores[0]: (1, n_0, R); cores[i]: (R, n_i, R); cores[-1]: (R, n_{d-1}, 1).
    Returns an array of shape `tensor_shape`.
    """
    d = len(tensor_shape)
    assert d >= 2
    n0, n_last = tensor_shape[0], tensor_shape[-1]
    scale = float(init_scale) / float(R ** (d - 1))

    # JAX-level glue (cheap metadata reshapes): drop the singleton edge ranks.
    c0 = cores[0].reshape(n0, R)                  # (n0, R)
    c_last = cores[-1].reshape(R, n_last)         # (R, n_last)
    mids = [cores[i] for i in range(1, d - 1)]    # each (R, n_i, R)
    inputs = [c0, *mids, c_last]

    inner_elems = int(np.prod(tensor_shape[1:]))
    if block_n0 is None:
        block_n0 = _choose_row_block(n0, inner_elems)
    assert n0 % block_n0 == 0 and (block_n0 == n0 or block_n0 % 8 == 0)
    num_blocks = n0 // block_n0

    kernel = functools.partial(_tt_fused_kernel, R=R, scale=scale)
    out_shape = jax.ShapeDtypeStruct(tuple(tensor_shape), cores[0].dtype)

    if num_blocks == 1:
        # Small problem: no grid machinery at all, whole arrays VMEM-resident.
        return pl.pallas_call(
            kernel,
            out_shape=out_shape,
            in_specs=[pl.BlockSpec(memory_space=pltpu.MemorySpace.VMEM)
                      for _ in inputs],
            out_specs=pl.BlockSpec(memory_space=pltpu.MemorySpace.VMEM),
        )(*inputs)

    # Row-tiled grid over the leading mode. Each row block of the first core is
    # fully independent -> "parallel" (sharded across TCs on v7x, no-op before).
    in_specs = [pl.BlockSpec((block_n0, R), lambda i: (i, 0))]
    for core in mids:
        in_specs.append(pl.BlockSpec(core.shape, lambda i: (0, 0, 0)))
    in_specs.append(pl.BlockSpec(c_last.shape, lambda i: (0, 0)))
    out_specs = pl.BlockSpec((block_n0,) + tuple(tensor_shape[1:]),
                             lambda i: (i,) + (0,) * (d - 1))
    return pl.pallas_call(
        kernel,
        out_shape=out_shape,
        grid=(num_blocks,),
        in_specs=in_specs,
        out_specs=out_specs,
        compiler_params=pltpu.CompilerParams(
            dimension_semantics=("parallel",)),
    )(*inputs)


def ref_forward(cores, R, init_scale=1.0):
    """Plain-JAX reference mirroring the PyTorch edge_mode_product chain."""
    preds = cores[0]
    for c in cores[1:]:
        preds = jnp.tensordot(preds, c, axes=[[preds.ndim - 1], [0]])
    factor = R ** (len(cores) - 1)
    return init_scale * preds[0, ..., 0] / factor


def _make_cores(key, tensor_shape, R):
    # Shapes match sub_factorization.__init__; deterministic random values
    # (instead of torch.ones) so the correctness check is non-trivial.
    d = len(tensor_shape)
    cores = []
    for i, n in enumerate(tensor_shape):
        key, sub = jax.random.split(key)
        if i == 0:
            shape = (1, n, R)
        elif i == d - 1:
            shape = (R, n, 1)
        else:
            shape = (R, n, R)
        cores.append(jax.random.normal(sub, shape, dtype=jnp.float32))
    return key, cores


if __name__ == "__main__":
    key = jax.random.PRNGKey(0)

    # Case 1: module's reference shape -> single fused kernel, no grid.
    shape1, R1, s1 = (8, 16, 128), 2, 1.0
    key, cores1 = _make_cores(key, shape1, R1)
    out1 = jax.block_until_ready(
        sub_factorization_forward(cores1, shape1, R1, s1))
    ref1 = ref_forward(cores1, R1, s1)
    assert out1.shape == shape1
    np.testing.assert_allclose(np.asarray(out1), np.asarray(ref1),
                               rtol=1e-5, atol=1e-5)

    # Case 2: exercises the row-tiled "parallel" grid path (grid=(4,)) and R=3.
    shape2, R2, s2 = (64, 16, 128), 3, 0.5
    key, cores2 = _make_cores(key, shape2, R2)
    out2 = jax.block_until_ready(
        sub_factorization_forward(cores2, shape2, R2, s2, block_n0=16))
    ref2 = ref_forward(cores2, R2, s2)
    assert out2.shape == shape2
    np.testing.assert_allclose(np.asarray(out2), np.asarray(ref2),
                               rtol=1e-5, atol=1e-5)

    # Case 3: 4-D tensor (two middle cores) -> multi-step fused chain.
    shape3, R3, s3 = (4, 8, 8, 128), 2, 2.0
    key, cores3 = _make_cores(key, shape3, R3)
    out3 = jax.block_until_ready(
        sub_factorization_forward(cores3, shape3, R3, s3))
    ref3 = ref_forward(cores3, R3, s3)
    assert out3.shape == shape3
    np.testing.assert_allclose(np.asarray(out3), np.asarray(ref3),
                               rtol=1e-5, atol=1e-5)

    print("KERNEL_OK")
</pallas_src>

<mosaic_0001>
module attributes {stable_mosaic.version = 11 : i64} {
  func.func @_tt_fused_kernel(%arg0: memref<8x2xf32, #tpu.memory_space<vmem>>, %arg1: memref<2x16x2xf32, #tpu.memory_space<vmem>>, %arg2: memref<2x128xf32, #tpu.memory_space<vmem>>, %arg3: memref<8x16x128xf32, #tpu.memory_space<vmem>>) attributes {dimension_semantics = [], scalar_prefetch = 0 : i64, scratch_operands = 0 : i64, tpu.core_type = #tpu.core_type<tc>} {
    %c0 = arith.constant 0 : index
    %c0_0 = arith.constant 0 : index
    %0 = vector.load %arg0[%c0, %c0_0] : memref<8x2xf32, #tpu.memory_space<vmem>>, vector<8x2xf32>
    %c0_1 = arith.constant 0 : index
    %c0_2 = arith.constant 0 : index
    %c0_3 = arith.constant 0 : index
    %1 = vector.load %arg1[%c0_1, %c0_2, %c0_3] : memref<2x16x2xf32, #tpu.memory_space<vmem>>, vector<2x16x2xf32>
    %2 = vector.extract_strided_slice %0 {offsets = [0, 0], sizes = [8, 1], strides = [1, 1]} : vector<8x2xf32> to vector<8x1xf32>
    %3 = vector.shape_cast %2 : vector<8x1xf32> to vector<8x1x1xf32>
    %4 = vector.extract_strided_slice %1 {offsets = [0, 0, 0], sizes = [1, 16, 2], strides = [1, 1, 1]} : vector<2x16x2xf32> to vector<1x16x2xf32>
    %5 = vector.shape_cast %4 : vector<1x16x2xf32> to vector<16x2xf32>
    %6 = vector.shape_cast %5 : vector<16x2xf32> to vector<1x16x2xf32>
    %7 = vector.broadcast %3 : vector<8x1x1xf32> to vector<8x16x2xf32>
    %8 = vector.broadcast %6 : vector<1x16x2xf32> to vector<8x16x2xf32>
    %9 = arith.mulf %7, %8 : vector<8x16x2xf32>
    %10 = vector.extract_strided_slice %0 {offsets = [0, 1], sizes = [8, 1], strides = [1, 1]} : vector<8x2xf32> to vector<8x1xf32>
    %11 = vector.shape_cast %10 : vector<8x1xf32> to vector<8x1x1xf32>
    %12 = vector.extract_strided_slice %1 {offsets = [1, 0, 0], sizes = [1, 16, 2], strides = [1, 1, 1]} : vector<2x16x2xf32> to vector<1x16x2xf32>
    %13 = vector.shape_cast %12 : vector<1x16x2xf32> to vector<16x2xf32>
    %14 = vector.shape_cast %13 : vector<16x2xf32> to vector<1x16x2xf32>
    %15 = vector.broadcast %11 : vector<8x1x1xf32> to vector<8x16x2xf32>
    %16 = vector.broadcast %14 : vector<1x16x2xf32> to vector<8x16x2xf32>
    %17 = arith.mulf %15, %16 : vector<8x16x2xf32>
    %18 = arith.addf %9, %17 : vector<8x16x2xf32>
    %c0_4 = arith.constant 0 : index
    %c0_5 = arith.constant 0 : index
    %19 = vector.load %arg2[%c0_4, %c0_5] : memref<2x128xf32, #tpu.memory_space<vmem>>, vector<2x128xf32>
    %cst = arith.constant 2.500000e-01 : f32
    %20 = vector.broadcast %cst : f32 to vector<2x128xf32>
    %21 = arith.mulf %19, %20 : vector<2x128xf32>
    %22 = vector.extract_strided_slice %18 {offsets = [0, 0, 0], sizes = [8, 16, 1], strides = [1, 1, 1]} : vector<8x16x2xf32> to vector<8x16x1xf32>
    %23 = vector.extract_strided_slice %21 {offsets = [0, 0], sizes = [1, 128], strides = [1, 1]} : vector<2x128xf32> to vector<1x128xf32>
    %24 = vector.shape_cast %23 : vector<1x128xf32> to vector<1x1x128xf32>
    %25 = vector.broadcast %22 : vector<8x16x1xf32> to vector<8x16x128xf32>
    %26 = vector.broadcast %24 : vector<1x1x128xf32> to vector<8x16x128xf32>
    %27 = arith.mulf %25, %26 : vector<8x16x128xf32>
    %28 = vector.extract_strided_slice %18 {offsets = [0, 0, 1], sizes = [8, 16, 1], strides = [1, 1, 1]} : vector<8x16x2xf32> to vector<8x16x1xf32>
    %29 = vector.extract_strided_slice %21 {offsets = [1, 0], sizes = [1, 128], strides = [1, 1]} : vector<2x128xf32> to vector<1x128xf32>
    %30 = vector.shape_cast %29 : vector<1x128xf32> to vector<1x1x128xf32>
    %31 = vector.broadcast %28 : vector<8x16x1xf32> to vector<8x16x128xf32>
    %32 = vector.broadcast %30 : vector<1x1x128xf32> to vector<8x16x128xf32>
    %33 = arith.mulf %31, %32 : vector<8x16x128xf32>
    %34 = arith.addf %27, %33 : vector<8x16x128xf32>
    %c0_6 = arith.constant 0 : index
    %c0_7 = arith.constant 0 : index
    %c0_8 = arith.constant 0 : index
    %35 = vector.load %arg3[%c0_6, %c0_7, %c0_8] : memref<8x16x128xf32, #tpu.memory_space<vmem>>, vector<8x16x128xf32>
    tpu.vector_store %arg3[%c0_6, %c0_7, %c0_8], %34 {strides = array<i32>} : memref<8x16x128xf32, #tpu.memory_space<vmem>>, vector<8x16x128xf32>,
    return
  }
}

</mosaic_0001>

<llo_original>
// kernel: tpu_custom_call.1
$region0: #{tpu_custom_call.1}
  #allocation0 [shape = 'u32[]', space=smem, size = 0x4, offset = 0x4, fixed_abs, tag = 'smem constant byte address 0x4 - core index']
  #allocation1 [shape = 'u32[144,128]{1,0:T(1,128)}', space=vmem, size = 0x12000, scoped, tag = 'internal scratch']
  %s0 = inlined_call_operand.vmem [shape: f32[8,2], index: 0, kind: input, shape index: {}]
  %s1 = inlined_call_operand.vmem [shape: f32[2,16,2], index: 1, kind: input, shape index: {}]
  %s2 = inlined_call_operand.vmem [shape: f32[2,128], index: 2, kind: input, shape index: {}]
  %s3 = inlined_call_operand.hbm [shape: f32[8,16,128], index: 3, kind: output, shape index: {}]
  %s4 = sld [smem:[#allocation0]]
  $region22: #{tpu_custom_call.1} parent=0
    _
  %s6 = ssub.s32 1, %s4
  %s7 = scalar_select 0, %s6, %s4
  $region1: #{tpu_custom_call.1} parent=0
    #allocation2 [shape = 'u8[65536]{0}', space=vmem, size = 0x10000, scoped, tag = 'output window, operand 0, single buffered']
    #allocation3 [shape = 's32[1]{0}', space=sflag, size = 0x4, scoped, tag = 'scoped memory for tpu_custom_call.1']
    %8 = vsyncpa [#allocation3], 0
    // Predicated region
    $region2: #{tpu_custom_call.1} parent=1 // pred_check
      _
    $region3: #{tpu_custom_call.1} parent=1 // pred_check_branch
      %10 = sbr.rel (0) target = $region5
    $region4: #{tpu_custom_call.1} parent=1 // pred_region
      _
    $region5: #{tpu_custom_call.1} parent=1 // pred_fallthru
      _
    // Predicated region
    $region6: #{tpu_custom_call.1} parent=1 // pred_check
      _
    $region7: #{tpu_custom_call.1} parent=1 // pred_check_branch
      %12 = sbr.rel (0) target = $region9
    $region8: #{tpu_custom_call.1} parent=1 // pred_region
      _
    $region9: #{tpu_custom_call.1} parent=1 // pred_fallthru
      _
    // Predicated region
    $region10: #{tpu_custom_call.1} parent=1 // pred_check
      _
    $region11: #{tpu_custom_call.1} parent=1 // pred_check_branch
      %14 = sbr.rel (0) target = $region13
    $region12: #{tpu_custom_call.1} parent=1 // pred_region
      _
    $region13: #{tpu_custom_call.1} parent=1 // pred_fallthru
      _
    %v15 = vld [vmem:[%s0] sm:$0xff]
    %v16 = vld [vmem:[%s1] sm:$0xff]
    %v17 = vld [vmem:[%s1 + $0x8] sm:$0xff]
    %v18 = vld [vmem:[%s1 + $0x10] sm:$0xff]
    %v19 = vld [vmem:[%s1 + $0x18] sm:$0xff]
    %v21 = vcombine.high %v15, %v15
    %v23 = vunpack.c.l.s4 1966171168
    %v24 = vunpack.c.0.s8 %v23
    %v25 = vlaneseq
    %v26 = vshrl.u32 %v25, 7
    %v27 = vsub.s32 %v24, %v26
    %v28 = vrot.slane %v15, %v27
    %v30 = vunpack.c.l.s4 1966171168
    %v31 = vunpack.c.0.s8 %v30
    %v32 = vlaneseq
    %v33 = vshrl.u32 %v32, 7
    %v34 = vsub.s32 %v31, %v33
    %v35 = vrot.slane %v21, %v34
    %v36 = vcombine.high %v28, %v28
    %v37 = vcombine.high %v35, %v35
    %v39 = vunpack.c.l.s4 1966171168
    %v40 = vunpack.c.0.s8 %v39
    %v41 = vlaneseq
    %v42 = vshrl.u32 %v41, 7
    %v43 = vsub.s32 %v40, %v42
    %v44 = vrot.slane %v28, %v43
    %v46 = vunpack.c.l.s4 1966171168
    %v47 = vunpack.c.0.s8 %v46
    %v48 = vlaneseq
    %v49 = vshrl.u32 %v48, 7
    %v50 = vsub.s32 %v47, %v49
    %v51 = vrot.slane %v35, %v50
    %v53 = vunpack.c.l.s4 1966171168
    %v54 = vunpack.c.0.s8 %v53
    %v55 = vlaneseq
    %v56 = vshrl.u32 %v55, 7
    %v57 = vsub.s32 %v54, %v56
    %v58 = vrot.slane %v36, %v57
    %v60 = vunpack.c.l.s4 1966171168
    %v61 = vunpack.c.0.s8 %v60
    %v62 = vlaneseq
    %v63 = vshrl.u32 %v62, 7
    %v64 = vsub.s32 %v61, %v63
    %v65 = vrot.slane %v37, %v64
    %v66 = vcombine.high %v44, %v44
    %v67 = vcombine.high %v51, %v51
    %v68 = vcombine.high %v58, %v58
    %v69 = vcombine.high %v65, %v65
    %v70 = vlaneseq
    %v71 = vshrl.u32 %v70, 7
    %v72 = vsub.s32 0, %v71
    %v73 = vrot.slane %v44, %v72
    %v74 = vlaneseq
    %v75 = vshrl.u32 %v74, 7
    %v76 = vsub.s32 0, %v75
    %v77 = vrot.slane %v58, %v76
    %v78 = vlaneseq
    %v79 = vshrl.u32 %v78, 7
    %v80 = vsub.s32 0, %v79
    %v81 = vrot.slane %v66, %v80
    %v82 = vlaneseq
    %v83 = vshrl.u32 %v82, 7
    %v84 = vsub.s32 0, %v83
    %v85 = vrot.slane %v68, %v84
    %v86 = vlaneseq
    %v87 = vshrl.u32 %v86, 7
    %v88 = vsub.s32 0, %v87
    %v89 = vrot.slane %v51, %v88
    %v90 = vlaneseq
    %v91 = vshrl.u32 %v90, 7
    %v92 = vsub.s32 0, %v91
    %v93 = vrot.slane %v65, %v92
    %v94 = vlaneseq
    %v95 = vshrl.u32 %v94, 7
    %v96 = vsub.s32 0, %v95
    %v97 = vrot.slane %v67, %v96
    %v98 = vlaneseq
    %v99 = vshrl.u32 %v98, 7
    %v100 = vsub.s32 0, %v99
    %v101 = vrot.slane %v69, %v100
    %102 = vset.pattern.permute.xlu0 0
    %103 = vperm.xlu0 %102, %v73
    %v104 = vpop.permute.xlu0 %103
    %106 = vset.pattern.permute.xlu0 0
    %107 = vperm.xlu0 %106, %v77
    %v108 = vpop.permute.xlu0 %107
    %110 = vset.pattern.permute.xlu0 0
    %111 = vperm.xlu0 %110, %v81
    %v112 = vpop.permute.xlu0 %111
    %114 = vset.pattern.permute.xlu0 0
    %115 = vperm.xlu0 %114, %v85
    %v116 = vpop.permute.xlu0 %115
    %118 = vset.pattern.permute.xlu0 0
    %119 = vperm.xlu0 %118, %v89
    %v120 = vpop.permute.xlu0 %119
    %122 = vset.pattern.permute.xlu0 0
    %123 = vperm.xlu0 %122, %v93
    %v124 = vpop.permute.xlu0 %123
    %126 = vset.pattern.permute.xlu0 0
    %127 = vperm.xlu0 %126, %v97
    %v128 = vpop.permute.xlu0 %127
    %130 = vset.pattern.permute.xlu0 0
    %131 = vperm.xlu0 %130, %v101
    %v132 = vpop.permute.xlu0 %131
    %v134 = vmul.f32 %v104, %v16
    %v135 = vmul.f32 %v104, %v17
    %v136 = vmul.f32 %v108, %v16
    %v137 = vmul.f32 %v108, %v17
    %v138 = vmul.f32 %v112, %v16
    %v139 = vmul.f32 %v112, %v17
    %v140 = vmul.f32 %v116, %v16
    %v141 = vmul.f32 %v116, %v17
    %v142 = vmul.f32 %v120, %v16
    %v143 = vmul.f32 %v120, %v17
    %v144 = vmul.f32 %v124, %v16
    %v145 = vmul.f32 %v124, %v17
    %v146 = vmul.f32 %v128, %v16
    %v147 = vmul.f32 %v128, %v17
    %v148 = vmul.f32 %v132, %v16
    %v149 = vmul.f32 %v132, %v17
    %150 = vset.pattern.permute.xlu0 1
    %151 = vperm.xlu0 %150, %v73
    %v152 = vpop.permute.xlu0 %151
    %154 = vset.pattern.permute.xlu0 1
    %155 = vperm.xlu0 %154, %v77
    %v156 = vpop.permute.xlu0 %155
    %158 = vset.pattern.permute.xlu0 1
    %159 = vperm.xlu0 %158, %v81
    %v160 = vpop.permute.xlu0 %159
    %162 = vset.pattern.permute.xlu0 1
    %163 = vperm.xlu0 %162, %v85
    %v164 = vpop.permute.xlu0 %163
    %166 = vset.pattern.permute.xlu0 1
    %167 = vperm.xlu0 %166, %v89
    %v168 = vpop.permute.xlu0 %167
    %170 = vset.pattern.permute.xlu0 1
    %171 = vperm.xlu0 %170, %v93
    %v172 = vpop.permute.xlu0 %171
    %174 = vset.pattern.permute.xlu0 1
    %175 = vperm.xlu0 %174, %v97
    %v176 = vpop.permute.xlu0 %175
    %178 = vset.pattern.permute.xlu0 1
    %179 = vperm.xlu0 %178, %v101
    %v180 = vpop.permute.xlu0 %179
    %v182 = vmul.f32 %v152, %v18
    %v183 = vmul.f32 %v152, %v19
    %v184 = vmul.f32 %v156, %v18
    %v185 = vmul.f32 %v156, %v19
    %v186 = vmul.f32 %v160, %v18
    %v187 = vmul.f32 %v160, %v19
    %v188 = vmul.f32 %v164, %v18
    %v189 = vmul.f32 %v164, %v19
    %v190 = vmul.f32 %v168, %v18
    %v191 = vmul.f32 %v168, %v19
    %v192 = vmul.f32 %v172, %v18
    %v193 = vmul.f32 %v172, %v19
    %v194 = vmul.f32 %v176, %v18
    %v195 = vmul.f32 %v176, %v19
    %v196 = vmul.f32 %v180, %v18
    %v197 = vmul.f32 %v180, %v19
    %v198 = vadd.f32 %v134, %v182
    %v199 = vadd.f32 %v135, %v183
    %v200 = vadd.f32 %v136, %v184
    %v201 = vadd.f32 %v137, %v185
    %v202 = vadd.f32 %v138, %v186
    %v203 = vadd.f32 %v139, %v187
    %v204 = vadd.f32 %v140, %v188
    %v205 = vadd.f32 %v141, %v189
    %v206 = vadd.f32 %v142, %v190
    %v207 = vadd.f32 %v143, %v191
    %v208 = vadd.f32 %v144, %v192
    %v209 = vadd.f32 %v145, %v193
    %v210 = vadd.f32 %v146, %v194
    %v211 = vadd.f32 %v147, %v195
    %v212 = vadd.f32 %v148, %v196
    %v213 = vadd.f32 %v149, %v197
    %v214 = vld [vmem:[%s2] sm:$0x3]
    %v215 = vmul.f32 %v214, 0.25
    %217 = vset.pattern.permute.xlu0 0
    %218 = vperm.xlu0 %217, %v198
    %v219 = vpop.permute.xlu0 %218
    %222 = vset.pattern.permute.xlu0 0
    %223 = vperm.xlu0 %222, %v199
    %v224 = vpop.permute.xlu0 %223
    %227 = vset.pattern.permute.xlu0 0
    %228 = vperm.xlu0 %227, %v200
    %v229 = vpop.permute.xlu0 %228
    %232 = vset.pattern.permute.xlu0 0
    %233 = vperm.xlu0 %232, %v201
    %v234 = vpop.permute.xlu0 %233
    %237 = vset.pattern.permute.xlu0 0
    %238 = vperm.xlu0 %237, %v202
    %v239 = vpop.permute.xlu0 %238
    %242 = vset.pattern.permute.xlu0 0
    %243 = vperm.xlu0 %242, %v203
    %v244 = vpop.permute.xlu0 %243
    %247 = vset.pattern.permute.xlu0 0
    %248 = vperm.xlu0 %247, %v204
    %v249 = vpop.permute.xlu0 %248
    %252 = vset.pattern.permute.xlu0 0
    %253 = vperm.xlu0 %252, %v205
    %v254 = vpop.permute.xlu0 %253
    %257 = vset.pattern.permute.xlu0 0
    %258 = vperm.xlu0 %257, %v206
    %v259 = vpop.permute.xlu0 %258
    %262 = vset.pattern.permute.xlu0 0
    %263 = vperm.xlu0 %262, %v207
    %v264 = vpop.permute.xlu0 %263
    %267 = vset.pattern.permute.xlu0 0
    %268 = vperm.xlu0 %267, %v208
    %v269 = vpop.permute.xlu0 %268
    %272 = vset.pattern.permute.xlu0 0
    %273 = vperm.xlu0 %272, %v209
    %v274 = vpop.permute.xlu0 %273
    %277 = vset.pattern.permute.xlu0 0
    %278 = vperm.xlu0 %277, %v210
    %v279 = vpop.permute.xlu0 %278
    %282 = vset.pattern.permute.xlu0 0
    %283 = vperm.xlu0 %282, %v211
    %v284 = vpop.permute.xlu0 %283
    %287 = vset.pattern.permute.xlu0 0
    %288 = vperm.xlu0 %287, %v212
    %v289 = vpop.permute.xlu0 %288
    %292 = vset.pattern.permute.xlu0 0
    %293 = vperm.xlu0 %292, %v213
    %v294 = vpop.permute.xlu0 %293
    %v296 = vlaneseq
    %v297 = vshrl.u32 %v296, 7
    %v298 = vsub.s32 0, %v297
    %v299 = vrot.slane %v215, %v298
    %v300 = vmul.f32 %v219, %v299
    %v301 = vmul.f32 %v224, %v299
    %v302 = vmul.f32 %v229, %v299
    %v303 = vmul.f32 %v234, %v299
    %v304 = vmul.f32 %v239, %v299
    %v305 = vmul.f32 %v244, %v299
    %v306 = vmul.f32 %v249, %v299
    %v307 = vmul.f32 %v254, %v299
    %v308 = vmul.f32 %v259, %v299
    %v309 = vmul.f32 %v264, %v299
    %v310 = vmul.f32 %v269, %v299
    %v311 = vmul.f32 %v274, %v299
    %v312 = vmul.f32 %v279, %v299
    %v313 = vmul.f32 %v284, %v299
    %v314 = vmul.f32 %v289, %v299
    %v315 = vmul.f32 %v294, %v299
    %316 = vset.pattern.permute.xlu0 1
    %317 = vperm.xlu0 %316, %v198
    %v318 = vpop.permute.xlu0 %317
    %320 = vset.pattern.permute.xlu0 1
    %321 = vperm.xlu0 %320, %v199
    %v322 = vpop.permute.xlu0 %321
    %324 = vset.pattern.permute.xlu0 1
    %325 = vperm.xlu0 %324, %v200
    %v326 = vpop.permute.xlu0 %325
    %328 = vset.pattern.permute.xlu0 1
    %329 = vperm.xlu0 %328, %v201
    %v330 = vpop.permute.xlu0 %329
    %332 = vset.pattern.permute.xlu0 1
    %333 = vperm.xlu0 %332, %v202
    %v334 = vpop.permute.xlu0 %333
    %336 = vset.pattern.permute.xlu0 1
    %337 = vperm.xlu0 %336, %v203
    %v338 = vpop.permute.xlu0 %337
    %340 = vset.pattern.permute.xlu0 1
    %341 = vperm.xlu0 %340, %v204
    %v342 = vpop.permute.xlu0 %341
    %344 = vset.pattern.permute.xlu0 1
    %345 = vperm.xlu0 %344, %v205
    %v346 = vpop.permute.xlu0 %345
    %348 = vset.pattern.permute.xlu0 1
    %349 = vperm.xlu0 %348, %v206
    %v350 = vpop.permute.xlu0 %349
    %352 = vset.pattern.permute.xlu0 1
    %353 = vperm.xlu0 %352, %v207
    %v354 = vpop.permute.xlu0 %353
    %356 = vset.pattern.permute.xlu0 1
    %357 = vperm.xlu0 %356, %v208
    %v358 = vpop.permute.xlu0 %357
    %360 = vset.pattern.permute.xlu0 1
    %361 = vperm.xlu0 %360, %v209
    %v362 = vpop.permute.xlu0 %361
    %364 = vset.pattern.permute.xlu0 1
    %365 = vperm.xlu0 %364, %v210
    %v366 = vpop.permute.xlu0 %365
    %368 = vset.pattern.permute.xlu0 1
    %369 = vperm.xlu0 %368, %v211
    %v370 = vpop.permute.xlu0 %369
    %372 = vset.pattern.permute.xlu0 1
    %373 = vperm.xlu0 %372, %v212
    %v374 = vpop.permute.xlu0 %373
    %376 = vset.pattern.permute.xlu0 1
    %377 = vperm.xlu0 %376, %v213
    %v378 = vpop.permute.xlu0 %377
    %v380 = vlaneseq
    %v381 = vshrl.u32 %v380, 7
    %v382 = vsub.s32 1, %v381
    %v383 = vrot.slane %v215, %v382
    %v384 = vmul.f32 %v318, %v383
    %v385 = vmul.f32 %v322, %v383
    %v386 = vmul.f32 %v326, %v383
    %v387 = vmul.f32 %v330, %v383
    %v388 = vmul.f32 %v334, %v383
    %v389 = vmul.f32 %v338, %v383
    %v390 = vmul.f32 %v342, %v383
    %v391 = vmul.f32 %v346, %v383
    %v392 = vmul.f32 %v350, %v383
    %v393 = vmul.f32 %v354, %v383
    %v394 = vmul.f32 %v358, %v383
    %v395 = vmul.f32 %v362, %v383
    %v396 = vmul.f32 %v366, %v383
    %v397 = vmul.f32 %v370, %v383
    %v398 = vmul.f32 %v374, %v383
    %v399 = vmul.f32 %v378, %v383
    %v400 = vadd.f32 %v300, %v384
    %v401 = vadd.f32 %v301, %v385
    %v402 = vadd.f32 %v302, %v386
    %v403 = vadd.f32 %v303, %v387
    %v404 = vadd.f32 %v304, %v388
    %v405 = vadd.f32 %v305, %v389
    %v406 = vadd.f32 %v306, %v390
    %v407 = vadd.f32 %v307, %v391
    %v408 = vadd.f32 %v308, %v392
    %v409 = vadd.f32 %v309, %v393
    %v410 = vadd.f32 %v310, %v394
    %v411 = vadd.f32 %v311, %v395
    %v412 = vadd.f32 %v312, %v396
    %v413 = vadd.f32 %v313, %v397
    %v414 = vadd.f32 %v314, %v398
    %v415 = vadd.f32 %v315, %v399
    %416 = vst [vmem:[#allocation2] sm:$0xff] %v400
    %417 = vst [vmem:[#allocation2 + $0x8] sm:$0xff] %v401
    %418 = vst [vmem:[#allocation2 + $0x10] sm:$0xff] %v402
    %419 = vst [vmem:[#allocation2 + $0x18] sm:$0xff] %v403
    %420 = vst [vmem:[#allocation2 + $0x20] sm:$0xff] %v404
    %421 = vst [vmem:[#allocation2 + $0x28] sm:$0xff] %v405
    %422 = vst [vmem:[#allocation2 + $0x30] sm:$0xff] %v406
    %423 = vst [vmem:[#allocation2 + $0x38] sm:$0xff] %v407
    %424 = vst [vmem:[#allocation2 + $0x40] sm:$0xff] %v408
    %425 = vst [vmem:[#allocation2 + $0x48] sm:$0xff] %v409
    %426 = vst [vmem:[#allocation2 + $0x50] sm:$0xff] %v410
    %427 = vst [vmem:[#allocation2 + $0x58] sm:$0xff] %v411
    %428 = vst [vmem:[#allocation2 + $0x60] sm:$0xff] %v412
    %429 = vst [vmem:[#allocation2 + $0x68] sm:$0xff] %v413
    %430 = vst [vmem:[#allocation2 + $0x70] sm:$0xff] %v414
    %431 = vst [vmem:[#allocation2 + $0x78] sm:$0xff] %v415
    // Predicated region
    $region14: #{tpu_custom_call.1} parent=1 // pred_check
      _
    $region15: #{tpu_custom_call.1} parent=1 // pred_check_branch
      %433 = sbr.rel (0) target = $region17
    $region16: #{tpu_custom_call.1} parent=1 // pred_region
      %s435 = ssub.s32 2048, 2048
      %436 = vsyncadd [#allocation3], %s435
      %s437 = sshll.u32 [#allocation2], 4
      %s438 = int_to_ptr.vmem [resolvable:$true] %s437
      %443 = dma.vmem_to_hbm [thread:$0]  %s438, 2048, %s3, [#allocation3], 128, 128, 8
    $region17: #{tpu_custom_call.1} parent=1 // pred_fallthru
      _
    // Predicated region
    $region18: #{tpu_custom_call.1} parent=1 // pred_check
      _
    $region19: #{tpu_custom_call.1} parent=1 // pred_check_branch
      %445 = sbr.rel (0) target = $region21
    $region20: #{tpu_custom_call.1} parent=1 // pred_region
      %446 = dma.done [#allocation3], 2048
    $region21: #{tpu_custom_call.1} parent=1 // pred_fallthru
      _
    %447 = vsyncpa [#allocation3], 1

</llo_original>
